<compile_context>
chip_gen: v7x
topology: tpu7x:2x2x1
jax: 0.10.0
libtpu: 0.0.40
codegen_flags: <defaults>
</compile_context>

<pallas_src>
import functools

import jax
import jax.numpy as jnp
from jax.experimental import pallas as pl
from jax.experimental.pallas import tpu as pltpu


def meteonet_kernel(x_ref, w1_ref, b1_ref, w2_ref, b2_ref, w3_ref, b3_ref,
                    o_ref, *, cn, small_layers_on_mxu):
    # Tiny parameter blocks: loaded once per grid step, live in a few vregs.
    w1 = w1_ref[...]          # (32, 2)
    b1 = b1_ref[...]          # (32, 1)
    w2 = w2_ref[...]          # (16, 32)
    b2 = b2_ref[...]          # (16, 1)
    w3 = w3_ref[...]          # (1, 16)
    b3 = b3_ref[...]          # (1, 1)

    n_chunks = x_ref.shape[1] // cn

    @pl.loop(0, n_chunks)
    def _(c):
        off = pl.multiple_of(c * cn, cn)
        xc = x_ref[:, pl.ds(off, cn)]                              # (2, cn)

        # ---- Layer 1: Linear(2, 32) + ReLU ----
        if small_layers_on_mxu:
            h1 = jnp.dot(w1, xc, preferred_element_type=jnp.float32)
        else:
            # VPU fallback: two broadcast FMAs.
            h1 = w1[:, 0:1] * xc[0:1, :] + w1[:, 1:2] * xc[1:2, :]
        h1 = jnp.maximum(h1 + b1, 0.0)                             # (32, cn)

        # ---- Layer 2: Linear(32, 16) + ReLU  (MXU) ----
        h2 = jnp.maximum(
            jnp.dot(w2, h1, preferred_element_type=jnp.float32) + b2, 0.0)  # (16, cn)

        # ---- Layer 3: Linear(16, 1) ----
        if small_layers_on_mxu:
            y = jnp.dot(w3, h2, preferred_element_type=jnp.float32) + b3    # (1, cn)
        else:
            y = jnp.sum(w3.T * h2, axis=0, keepdims=True) + b3

        o_ref[:, pl.ds(off, cn)] = y.astype(o_ref.dtype)


def meteonet_forward(x, params, *, bn=16384, cn=512, small_layers_on_mxu=True):
    """x: (N, 2) float32 (PyTorch convention). Returns (N, 1) float32.

    Internally runs feature-major with the batch on the lane axis.  `bn` is the
    per-grid-step batch tile (multiple of `cn`), `cn` the inner-loop chunk kept
    entirely in vregs (multiple of 128).
    """
    assert cn % 128 == 0, "chunk must be a multiple of 128 lanes"
    assert bn % cn == 0, "batch tile must be a multiple of the chunk size"
    w1, b1, w2, b2, w3, b3 = params      # PyTorch layout: W (out, in), b (out,)
    h1_dim, in_dim = w1.shape            # (32, 2)
    h2_dim = w2.shape[0]                 # 16

    N = x.shape[0]
    n_pad = pl.cdiv(N, bn) * bn

    # Lane-dense layout: (in_dim, n_pad), batch on the last (lane) axis.
    x_t = jnp.pad(x.astype(jnp.float32).T, ((0, 0), (0, n_pad - N)))

    w1f = w1.astype(jnp.float32)
    b1c = b1.reshape(h1_dim, 1).astype(jnp.float32)
    w2f = w2.astype(jnp.float32)
    b2c = b2.reshape(h2_dim, 1).astype(jnp.float32)
    w3f = w3.reshape(1, h2_dim).astype(jnp.float32)
    b3c = b3.reshape(1, 1).astype(jnp.float32)

    kernel = functools.partial(meteonet_kernel, cn=cn,
                               small_layers_on_mxu=small_layers_on_mxu)

    out_t = pl.pallas_call(
        kernel,
        out_shape=jax.ShapeDtypeStruct((1, n_pad), jnp.float32),
        grid_spec=pltpu.PrefetchScalarGridSpec(
            num_scalar_prefetch=0,
            grid=(n_pad // bn,),
            in_specs=[
                pl.BlockSpec((in_dim, bn), lambda i: (0, i)),      # x tile
                pl.BlockSpec((h1_dim, in_dim), lambda i: (0, 0)),  # w1
                pl.BlockSpec((h1_dim, 1), lambda i: (0, 0)),       # b1
                pl.BlockSpec((h2_dim, h1_dim), lambda i: (0, 0)),  # w2
                pl.BlockSpec((h2_dim, 1), lambda i: (0, 0)),       # b2
                pl.BlockSpec((1, h2_dim), lambda i: (0, 0)),       # w3
                pl.BlockSpec((1, 1), lambda i: (0, 0)),            # b3
            ],
            out_specs=pl.BlockSpec((1, bn), lambda i: (0, i)),     # lane-dense y
        ),
        compiler_params=pltpu.CompilerParams(
            dimension_semantics=("parallel",)),
    )(x_t, w1f, b1c, w2f, b2c, w3f, b3c)

    return out_t[:, :N].T                                          # (N, 1)


def init_params(key):
    """Deterministic init mimicking nn.Linear default (uniform +-1/sqrt(fan_in)).
    Stored in the native PyTorch layout: W (out, in), b (out,)."""
    ks = jax.random.split(key, 6)

    def lin(kw, kb, fan_in, fan_out):
        bound = 1.0 / jnp.sqrt(float(fan_in))
        w = jax.random.uniform(kw, (fan_out, fan_in), jnp.float32, -bound, bound)
        b = jax.random.uniform(kb, (fan_out,), jnp.float32, -bound, bound)
        return w, b

    w1, b1 = lin(ks[0], ks[1], 2, 32)
    w2, b2 = lin(ks[2], ks[3], 32, 16)
    w3, b3 = lin(ks[4], ks[5], 16, 1)
    return (w1, b1, w2, b2, w3, b3)


def meteonet_ref(x, params):
    w1, b1, w2, b2, w3, b3 = params
    h1 = jnp.maximum(x @ w1.T + b1, 0.0)
    h2 = jnp.maximum(h1 @ w2.T + b2, 0.0)
    return h2 @ w3.T + b3


if __name__ == "__main__":
    key = jax.random.PRNGKey(0)
    kx, kp = jax.random.split(key)

    N = 300  # deliberately ragged (not a multiple of 128) to exercise padding
    x = jax.random.normal(kx, (N, 2), dtype=jnp.float32)
    params = init_params(kp)
    ref = meteonet_ref(x, params)

    # Small demo tiling: 2 grid steps x 2 inner chunks per step.
    # Production default is bn=16384, cn=512 (choose bn so grid has >=2 steps).
    def run_and_check(small_layers_on_mxu):
        out = meteonet_forward(x, params, bn=256, cn=128,
                               small_layers_on_mxu=small_layers_on_mxu)
        out = jax.block_until_ready(out)
        assert out.shape == (N, 1)
        assert jnp.allclose(out, ref, atol=1e-4, rtol=1e-4), "mismatch vs ref"
        return out

    try:
        out = run_and_check(True)      # preferred: layers 1 & 3 on the MXU
    except Exception:
        out = run_and_check(False)     # robustness fallback: tiny dots on VPU

    print("KERNEL_OK")
</pallas_src>

<mosaic_0001>
module attributes {stable_mosaic.version = 11 : i64} {
  func.func @meteonet_kernel(%arg0: i32, %arg1: memref<2x256xf32, #tpu.memory_space<vmem>>, %arg2: memref<32x2xf32, #tpu.memory_space<vmem>>, %arg3: memref<32x1xf32, #tpu.memory_space<vmem>>, %arg4: memref<16x32xf32, #tpu.memory_space<vmem>>, %arg5: memref<16x1xf32, #tpu.memory_space<vmem>>, %arg6: memref<1x16xf32, #tpu.memory_space<vmem>>, %arg7: memref<1x1xf32, #tpu.memory_space<vmem>>, %arg8: memref<1x256xf32, #tpu.memory_space<vmem>>) attributes {dimension_semantics = [#tpu.dimension_semantics<parallel>], iteration_bounds = array<i64: 2>, scalar_prefetch = 0 : i64, scratch_operands = 0 : i64, tpu.core_type = #tpu.core_type<tc>, window_params = [{transform_indices = @transform_0, window_bounds = array<i64: 2, 256>}, {pipeline_mode = #tpu.pipeline_mode<synchronous>, transform_indices = @transform_1, window_bounds = array<i64: 32, 2>}, {pipeline_mode = #tpu.pipeline_mode<synchronous>, transform_indices = @transform_2, window_bounds = array<i64: 32, 1>}, {pipeline_mode = #tpu.pipeline_mode<synchronous>, transform_indices = @transform_3, window_bounds = array<i64: 16, 32>}, {pipeline_mode = #tpu.pipeline_mode<synchronous>, transform_indices = @transform_4, window_bounds = array<i64: 16, 1>}, {pipeline_mode = #tpu.pipeline_mode<synchronous>, transform_indices = @transform_5, window_bounds = array<i64: 1, 16>}, {pipeline_mode = #tpu.pipeline_mode<synchronous>, transform_indices = @transform_6, window_bounds = array<i64: 1, 1>}, {transform_indices = @transform_7, window_bounds = array<i64: 1, 256>}]} {
    %c0 = arith.constant 0 : index
    %c0_0 = arith.constant 0 : index
    %0 = vector.load %arg2[%c0, %c0_0] : memref<32x2xf32, #tpu.memory_space<vmem>>, vector<32x2xf32>
    %c0_1 = arith.constant 0 : index
    %c0_2 = arith.constant 0 : index
    %1 = vector.load %arg3[%c0_1, %c0_2] : memref<32x1xf32, #tpu.memory_space<vmem>>, vector<32x1xf32>
    %c0_3 = arith.constant 0 : index
    %c0_4 = arith.constant 0 : index
    %2 = vector.load %arg4[%c0_3, %c0_4] : memref<16x32xf32, #tpu.memory_space<vmem>>, vector<16x32xf32>
    %c0_5 = arith.constant 0 : index
    %c0_6 = arith.constant 0 : index
    %3 = vector.load %arg5[%c0_5, %c0_6] : memref<16x1xf32, #tpu.memory_space<vmem>>, vector<16x1xf32>
    %c0_7 = arith.constant 0 : index
    %c0_8 = arith.constant 0 : index
    %4 = vector.load %arg6[%c0_7, %c0_8] : memref<1x16xf32, #tpu.memory_space<vmem>>, vector<1x16xf32>
    %c0_9 = arith.constant 0 : index
    %c0_10 = arith.constant 0 : index
    %5 = vector.load %arg7[%c0_9, %c0_10] : memref<1x1xf32, #tpu.memory_space<vmem>>, vector<1x1xf32>
    %c0_i32 = arith.constant 0 : i32
    %c2_i32 = arith.constant 2 : i32
    %6 = arith.addi %c0_i32, %c2_i32 : i32
    %c1_i32 = arith.constant 1 : i32
    scf.for %arg9 = %c0_i32 to %6 step %c1_i32  : i32 {
      %c1_i32_12 = arith.constant 1 : i32
      %7 = arith.muli %arg9, %c1_i32_12 : i32
      %c0_i32_13 = arith.constant 0 : i32
      %8 = arith.addi %c0_i32_13, %7 : i32
      %c128_i32 = arith.constant 128 : i32
      %9 = arith.muli %8, %c128_i32 : i32
      %10 = tpu.assume_multiple %9, 128 : i32
      %c0_14 = arith.constant 0 : index
      %11 = arith.index_cast %10 : i32 to index
      %12 = vector.load %arg1[%c0_14, %11] : memref<2x256xf32, #tpu.memory_space<vmem>>, vector<2x128xf32>
      %cst = arith.constant dense<0.000000e+00> : vector<32x128xf32>
      %13 = tpu.matmul %0, %12, %cst {dimension_numbers = #tpu.dot_dimension_numbers<[1], [0], [0], [1], [0, 0, 1, 1], [], []>} : vector<32x2xf32>, vector<2x128xf32>, vector<32x128xf32> -> vector<32x128xf32>
      %14 = vector.broadcast %1 : vector<32x1xf32> to vector<32x128xf32>
      %15 = arith.addf %13, %14 : vector<32x128xf32>
      %cst_15 = arith.constant 0.000000e+00 : f32
      %16 = vector.broadcast %cst_15 : f32 to vector<32x128xf32>
      %17 = arith.maximumf %15, %16 : vector<32x128xf32>
      %cst_16 = arith.constant dense<0.000000e+00> : vector<16x128xf32>
      %18 = tpu.matmul %2, %17, %cst_16 {dimension_numbers = #tpu.dot_dimension_numbers<[1], [0], [0], [1], [0, 0, 1, 1], [], []>} : vector<16x32xf32>, vector<32x128xf32>, vector<16x128xf32> -> vector<16x128xf32>
      %19 = vector.broadcast %3 : vector<16x1xf32> to vector<16x128xf32>
      %20 = arith.addf %18, %19 : vector<16x128xf32>
      %cst_17 = arith.constant 0.000000e+00 : f32
      %21 = vector.broadcast %cst_17 : f32 to vector<16x128xf32>
      %22 = arith.maximumf %20, %21 : vector<16x128xf32>
      %cst_18 = arith.constant dense<0.000000e+00> : vector<1x128xf32>
      %23 = tpu.matmul %4, %22, %cst_18 {dimension_numbers = #tpu.dot_dimension_numbers<[1], [0], [0], [1], [0, 0, 1, 1], [], []>} : vector<1x16xf32>, vector<16x128xf32>, vector<1x128xf32> -> vector<1x128xf32>
      %24 = vector.broadcast %5 : vector<1x1xf32> to vector<1x128xf32>
      %25 = arith.addf %23, %24 : vector<1x128xf32>
      %c0_19 = arith.constant 0 : index
      %26 = arith.index_cast %10 : i32 to index
      %27 = vector.load %arg8[%c0_19, %26] : memref<1x256xf32, #tpu.memory_space<vmem>>, vector<1x128xf32>
      tpu.vector_store %arg8[%c0_19, %26], %25 {strides = array<i32>} : memref<1x256xf32, #tpu.memory_space<vmem>>, vector<1x128xf32>,
    }
    %c2_i32_11 = arith.constant 2 : i32
    return
  }
  func.func @transform_0(%arg0: i32) -> (i32, i32) {
    %c0_i32 = arith.constant 0 : i32
    %c0_i32_0 = arith.constant 0 : i32
    return %c0_i32, %arg0 : i32, i32
  }
  func.func @transform_1(%arg0: i32) -> (i32, i32) {
    %c0_i32 = arith.constant 0 : i32
    %c0_i32_0 = arith.constant 0 : i32
    %c0_i32_1 = arith.constant 0 : i32
    return %c0_i32, %c0_i32_0 : i32, i32
  }
  func.func @transform_2(%arg0: i32) -> (i32, i32) {
    %c0_i32 = arith.constant 0 : i32
    %c0_i32_0 = arith.constant 0 : i32
    %c0_i32_1 = arith.constant 0 : i32
    return %c0_i32, %c0_i32_0 : i32, i32
  }
  func.func @transform_3(%arg0: i32) -> (i32, i32) {
    %c0_i32 = arith.constant 0 : i32
    %c0_i32_0 = arith.constant 0 : i32
    %c0_i32_1 = arith.constant 0 : i32
    return %c0_i32, %c0_i32_0 : i32, i32
  }
  func.func @transform_4(%arg0: i32) -> (i32, i32) {
    %c0_i32 = arith.constant 0 : i32
    %c0_i32_0 = arith.constant 0 : i32
    %c0_i32_1 = arith.constant 0 : i32
    return %c0_i32, %c0_i32_0 : i32, i32
  }
  func.func @transform_5(%arg0: i32) -> (i32, i32) {
    %c0_i32 = arith.constant 0 : i32
    %c0_i32_0 = arith.constant 0 : i32
    %c0_i32_1 = arith.constant 0 : i32
    return %c0_i32, %c0_i32_0 : i32, i32
  }
  func.func @transform_6(%arg0: i32) -> (i32, i32) {
    %c0_i32 = arith.constant 0 : i32
    %c0_i32_0 = arith.constant 0 : i32
    %c0_i32_1 = arith.constant 0 : i32
    return %c0_i32, %c0_i32_0 : i32, i32
  }
  func.func @transform_7(%arg0: i32) -> (i32, i32) {
    %c0_i32 = arith.constant 0 : i32
    %c0_i32_0 = arith.constant 0 : i32
    return %c0_i32, %arg0 : i32, i32
  }
}

module attributes {stable_mosaic.version = 11 : i64} {
  func.func @meteonet_kernel(%arg0: i32, %arg1: memref<2x256xf32, #tpu.memory_space<vmem>>, %arg2: memref<32x2xf32, #tpu.memory_space<vmem>>, %arg3: memref<32x1xf32, #tpu.memory_space<vmem>>, %arg4: memref<16x32xf32, #tpu.memory_space<vmem>>, %arg5: memref<16x1xf32, #tpu.memory_space<vmem>>, %arg6: memref<1x16xf32, #tpu.memory_space<vmem>>, %arg7: memref<1x1xf32, #tpu.memory_space<vmem>>, %arg8: memref<1x256xf32, #tpu.memory_space<vmem>>) attributes {dimension_semantics = [#tpu.dimension_semantics<parallel>], iteration_bounds = array<i64: 2>, scalar_prefetch = 0 : i64, scratch_operands = 0 : i64, tpu.core_type = #tpu.core_type<tc>, window_params = [{transform_indices = @transform_0, window_bounds = array<i64: 2, 256>}, {pipeline_mode = #tpu.pipeline_mode<synchronous>, transform_indices = @transform_1, window_bounds = array<i64: 32, 2>}, {pipeline_mode = #tpu.pipeline_mode<synchronous>, transform_indices = @transform_2, window_bounds = array<i64: 32, 1>}, {pipeline_mode = #tpu.pipeline_mode<synchronous>, transform_indices = @transform_3, window_bounds = array<i64: 16, 32>}, {pipeline_mode = #tpu.pipeline_mode<synchronous>, transform_indices = @transform_4, window_bounds = array<i64: 16, 1>}, {pipeline_mode = #tpu.pipeline_mode<synchronous>, transform_indices = @transform_5, window_bounds = array<i64: 1, 16>}, {pipeline_mode = #tpu.pipeline_mode<synchronous>, transform_indices = @transform_6, window_bounds = array<i64: 1, 1>}, {transform_indices = @transform_7, window_bounds = array<i64: 1, 256>}]} {
    %c0 = arith.constant 0 : index
    %c0_0 = arith.constant 0 : index
    %0 = vector.load %arg2[%c0, %c0_0] : memref<32x2xf32, #tpu.memory_space<vmem>>, vector<32x2xf32>
    %c0_1 = arith.constant 0 : index
    %c0_2 = arith.constant 0 : index
    %1 = vector.load %arg3[%c0_1, %c0_2] : memref<32x1xf32, #tpu.memory_space<vmem>>, vector<32x1xf32>
    %c0_3 = arith.constant 0 : index
    %c0_4 = arith.constant 0 : index
    %2 = vector.load %arg4[%c0_3, %c0_4] : memref<16x32xf32, #tpu.memory_space<vmem>>, vector<16x32xf32>
    %c0_5 = arith.constant 0 : index
    %c0_6 = arith.constant 0 : index
    %3 = vector.load %arg5[%c0_5, %c0_6] : memref<16x1xf32, #tpu.memory_space<vmem>>, vector<16x1xf32>
    %c0_7 = arith.constant 0 : index
    %c0_8 = arith.constant 0 : index
    %4 = vector.load %arg6[%c0_7, %c0_8] : memref<1x16xf32, #tpu.memory_space<vmem>>, vector<1x16xf32>
    %c0_9 = arith.constant 0 : index
    %c0_10 = arith.constant 0 : index
    %5 = vector.load %arg7[%c0_9, %c0_10] : memref<1x1xf32, #tpu.memory_space<vmem>>, vector<1x1xf32>
    %c0_i32 = arith.constant 0 : i32
    %c2_i32 = arith.constant 2 : i32
    %6 = arith.addi %c0_i32, %c2_i32 : i32
    %c1_i32 = arith.constant 1 : i32
    scf.for %arg9 = %c0_i32 to %6 step %c1_i32  : i32 {
      %c1_i32_12 = arith.constant 1 : i32
      %7 = arith.muli %arg9, %c1_i32_12 : i32
      %c0_i32_13 = arith.constant 0 : i32
      %8 = arith.addi %c0_i32_13, %7 : i32
      %c128_i32 = arith.constant 128 : i32
      %9 = arith.muli %8, %c128_i32 : i32
      %10 = tpu.assume_multiple %9, 128 : i32
      %c0_14 = arith.constant 0 : index
      %11 = arith.index_cast %10 : i32 to index
      %12 = vector.load %arg1[%c0_14, %11] : memref<2x256xf32, #tpu.memory_space<vmem>>, vector<2x128xf32>
      %13 = vector.extract_strided_slice %0 {offsets = [0, 0], sizes = [32, 1], strides = [1, 1]} : vector<32x2xf32> to vector<32x1xf32>
      %14 = vector.extract_strided_slice %12 {offsets = [0, 0], sizes = [1, 128], strides = [1, 1]} : vector<2x128xf32> to vector<1x128xf32>
      %15 = vector.broadcast %13 : vector<32x1xf32> to vector<32x128xf32>
      %16 = vector.broadcast %14 : vector<1x128xf32> to vector<32x128xf32>
      %17 = arith.mulf %15, %16 : vector<32x128xf32>
      %18 = vector.extract_strided_slice %0 {offsets = [0, 1], sizes = [32, 1], strides = [1, 1]} : vector<32x2xf32> to vector<32x1xf32>
      %19 = vector.extract_strided_slice %12 {offsets = [1, 0], sizes = [1, 128], strides = [1, 1]} : vector<2x128xf32> to vector<1x128xf32>
      %20 = vector.broadcast %18 : vector<32x1xf32> to vector<32x128xf32>
      %21 = vector.broadcast %19 : vector<1x128xf32> to vector<32x128xf32>
      %22 = arith.mulf %20, %21 : vector<32x128xf32>
      %23 = arith.addf %17, %22 : vector<32x128xf32>
      %24 = vector.broadcast %1 : vector<32x1xf32> to vector<32x128xf32>
      %25 = arith.addf %23, %24 : vector<32x128xf32>
      %cst = arith.constant 0.000000e+00 : f32
      %26 = vector.broadcast %cst : f32 to vector<32x128xf32>
      %27 = arith.maximumf %25, %26 : vector<32x128xf32>
      %cst_15 = arith.constant dense<0.000000e+00> : vector<16x128xf32>
      %28 = tpu.matmul %2, %27, %cst_15 {dimension_numbers = #tpu.dot_dimension_numbers<[1], [0], [0], [1], [0, 0, 1, 1], [], []>} : vector<16x32xf32>, vector<32x128xf32>, vector<16x128xf32> -> vector<16x128xf32>
      %29 = vector.broadcast %3 : vector<16x1xf32> to vector<16x128xf32>
      %30 = arith.addf %28, %29 : vector<16x128xf32>
      %cst_16 = arith.constant 0.000000e+00 : f32
      %31 = vector.broadcast %cst_16 : f32 to vector<16x128xf32>
      %32 = arith.maximumf %30, %31 : vector<16x128xf32>
      %33 = tpu.transpose %4, [1, 0] : vector<1x16xf32> -> vector<16x1xf32>
      %34 = vector.broadcast %33 : vector<16x1xf32> to vector<16x128xf32>
      %35 = arith.mulf %34, %32 : vector<16x128xf32>
      %cst_17 = arith.constant dense<0.000000e+00> : vector<128xf32>
      %36 = vector.multi_reduction <add>, %35, %cst_17 [0] : vector<16x128xf32> to vector<128xf32>
      %37 = vector.shape_cast %36 : vector<128xf32> to vector<1x128xf32>
      %38 = vector.broadcast %5 : vector<1x1xf32> to vector<1x128xf32>
      %39 = arith.addf %37, %38 : vector<1x128xf32>
      %c0_18 = arith.constant 0 : index
      %40 = arith.index_cast %10 : i32 to index
      %41 = vector.load %arg8[%c0_18, %40] : memref<1x256xf32, #tpu.memory_space<vmem>>, vector<1x128xf32>
      tpu.vector_store %arg8[%c0_18, %40], %39 {strides = array<i32>} : memref<1x256xf32, #tpu.memory_space<vmem>>, vector<1x128xf32>,
    }
    %c2_i32_11 = arith.constant 2 : i32
    return
  }
  func.func @transform_0(%arg0: i32) -> (i32, i32) {
    %c0_i32 = arith.constant 0 : i32
    %c0_i32_0 = arith.constant 0 : i32
    return %c0_i32, %arg0 : i32, i32
  }
  func.func @transform_1(%arg0: i32) -> (i32, i32) {
    %c0_i32 = arith.constant 0 : i32
    %c0_i32_0 = arith.constant 0 : i32
    %c0_i32_1 = arith.constant 0 : i32
    return %c0_i32, %c0_i32_0 : i32, i32
  }
  func.func @transform_2(%arg0: i32) -> (i32, i32) {
    %c0_i32 = arith.constant 0 : i32
    %c0_i32_0 = arith.constant 0 : i32
    %c0_i32_1 = arith.constant 0 : i32
    return %c0_i32, %c0_i32_0 : i32, i32
  }
  func.func @transform_3(%arg0: i32) -> (i32, i32) {
    %c0_i32 = arith.constant 0 : i32
    %c0_i32_0 = arith.constant 0 : i32
    %c0_i32_1 = arith.constant 0 : i32
    return %c0_i32, %c0_i32_0 : i32, i32
  }
  func.func @transform_4(%arg0: i32) -> (i32, i32) {
    %c0_i32 = arith.constant 0 : i32
    %c0_i32_0 = arith.constant 0 : i32
    %c0_i32_1 = arith.constant 0 : i32
    return %c0_i32, %c0_i32_0 : i32, i32
  }
  func.func @transform_5(%arg0: i32) -> (i32, i32) {
    %c0_i32 = arith.constant 0 : i32
    %c0_i32_0 = arith.constant 0 : i32
    %c0_i32_1 = arith.constant 0 : i32
    return %c0_i32, %c0_i32_0 : i32, i32
  }
  func.func @transform_6(%arg0: i32) -> (i32, i32) {
    %c0_i32 = arith.constant 0 : i32
    %c0_i32_0 = arith.constant 0 : i32
    %c0_i32_1 = arith.constant 0 : i32
    return %c0_i32, %c0_i32_0 : i32, i32
  }
  func.func @transform_7(%arg0: i32) -> (i32, i32) {
    %c0_i32 = arith.constant 0 : i32
    %c0_i32_0 = arith.constant 0 : i32
    return %c0_i32, %arg0 : i32, i32
  }
}

</mosaic_0001>

<llo_original>
// kernel: tpu_custom_call.1
$region0: #{tpu_custom_call.1}
  #allocation0 [shape = 'u32[]', space=smem, size = 0x4, offset = 0x4, fixed_abs, tag = 'smem constant byte address 0x4 - core index']
  #allocation1 [shape = 'u32[144,128]{1,0:T(1,128)}', space=vmem, size = 0x12000, scoped, tag = 'internal scratch']
  #allocation2 [shape = 'f32[1,1]{1,0:T(1,128)S(1)}', space=vmem, size = 0x200, scoped, tag = 'scoped memory for tpu_custom_call.1']
  %s0 = inlined_call_operand.vmem [shape: f32[2,512], index: 0, kind: input, shape index: {}]
  %s1 = inlined_call_operand.vmem [shape: f32[32,2], index: 1, kind: input, shape index: {}]
  %s2 = inlined_call_operand.vmem [shape: f32[32,1], index: 2, kind: input, shape index: {}]
  %s3 = inlined_call_operand.vmem [shape: f32[16,32], index: 3, kind: input, shape index: {}]
  %s4 = inlined_call_operand.vmem [shape: f32[16,1], index: 4, kind: input, shape index: {}]
  %s5 = inlined_call_operand.vmem [shape: f32[1,16], index: 5, kind: input, shape index: {}]
  %s6 = inlined_call_operand.<no memory space> [shape: f32[1,1], index: 6, kind: input, shape index: {}]
  %s7 = inlined_call_operand.hbm [shape: f32[1,512], index: 7, kind: output, shape index: {}]
  %s8 = sld [smem:[#allocation0]]
  $region68: #{tpu_custom_call.1} parent=0
    _
  %s10 = ssub.s32 1, %s8
  %s11 = scalar_select 0, %s10, %s8
  %v12 = vstv %s6
  %13 = vst [vmem:[#allocation2] sm:$0x1] %v12
  $region1: #{tpu_custom_call.1} parent=0
    #allocation3 [shape = 'u8[2048]{0}', space=vmem, size = 0x800, scoped, tag = 'output window, operand 0']
    #allocation4 [shape = 's32[2]{0}', space=sflag, size = 0x8, scoped, tag = 'scoped memory for tpu_custom_call.1']
    %14 = vsyncpa [#allocation4], 0
    %s15 = scalar_lea.sflag [#allocation4], 1
    %16 = vsyncpa %s15, 0
    loop: start=0, step=1, limit=4
    $region2: #{tpu_custom_call.1} parent=1 // loop_pre_header
      _
    $region3: #{tpu_custom_call.1} parent=1 // loop_header
      %s18 = sphi 0, %s22
      %p19 = scmp.ge.s32.totalorder %s18, 4
      %s28 = sphi 0, %s30
      %s31 = sphi 0, %s28
      %s32 = sphi 0, %s31
      %s48 = sphi 0, %s32
      %s52 = sphi 0, %s52
      %s54 = sphi 0, %s52
      %s55 = sphi 0, %s54
      %s69 = sphi 0, %s55
      %s73 = sphi 0, %s73
      %s75 = sphi 0, %s73
      %s76 = sphi 0, %s75
      %s90 = sphi 0, %s76
      %s94 = sphi 0, %s94
      %s96 = sphi 0, %s94
      %s97 = sphi 0, %s96
      %s111 = sphi 0, %s97
      %s115 = sphi 0, %s115
      %s117 = sphi 0, %s115
      %s118 = sphi 0, %s117
      %s132 = sphi 0, %s118
      %s136 = sphi 0, %s136
      %s138 = sphi 0, %s136
      %s139 = sphi 0, %s138
      %s153 = sphi 0, %s139
      %s157 = sphi 0, %s157
      %s159 = sphi 0, %s157
      %s160 = sphi 0, %s159
      %s174 = sphi 0, %s160
      %s180 = sphi 0, %s182
      %s183 = sphi 0, %s180
      %s184 = sphi 0, %s183
      %s200 = sphi 0, %s184
    $region4: #{tpu_custom_call.1} parent=1 // loop_header_branch
      %21 = sbr.rel (%p19) target = $region8
    $region5: #{tpu_custom_call.1} parent=1 // loop_body
      %s23 = ssub.s32 %s18, 1
      %s24 = ssub.s32 %s18, 2
      %s25 = sadd.s32 %s18, 1
      %s26 = ssub.s32 %s18, %s25
      %p27 = scmp.eq.s32.totalorder %s26, 0
      %s29 = sadd.s32 %s28, 1
      %s30 = scalar_select %p27, %s28, %s29
      %p33 = pneg %p27
      %p34 = scmp.eq.s32.totalorder %s18, 1
      %p35 = por %p33, %p34
      %p36 = scmp.ne.s32.totalorder %s28, %s31
      %p37 = scmp.eq.s32.totalorder %s18, 0
      %p38 = por %p36, %p37
      %p39 = scmp.ne.s32.totalorder %s28, %s31
      %p40 = scmp.eq.s32.totalorder %s23, 1
      %p41 = por %p39, %p40
      %p42 = scmp.ne.s32.totalorder %s31, %s32
      %p43 = scmp.eq.s32.totalorder %s23, 0
      %p44 = por %p42, %p43
      %p45 = scmp.ne.s32.totalorder %s31, %s32
      %p46 = scmp.eq.s32.totalorder %s24, 1
      %p47 = por %p45, %p46
      %p49 = scmp.ne.s32.totalorder %s32, %s48
      %p50 = scmp.eq.s32.totalorder %s24, 0
      %p51 = por %p49, %p50
      %s53 = sadd.s32 %s52, 1
      %p56 = scmp.eq.s32.totalorder %s18, 1
      %p57 = scmp.ne.s32.totalorder %s52, %s54
      %p58 = scmp.eq.s32.totalorder %s18, 0
      %p59 = por %p57, %p58
      %p60 = scmp.ne.s32.totalorder %s52, %s54
      %p61 = scmp.eq.s32.totalorder %s23, 1
      %p62 = por %p60, %p61
      %p63 = scmp.ne.s32.totalorder %s54, %s55
      %p64 = scmp.eq.s32.totalorder %s23, 0
      %p65 = por %p63, %p64
      %p66 = scmp.ne.s32.totalorder %s54, %s55
      %p67 = scmp.eq.s32.totalorder %s24, 1
      %p68 = por %p66, %p67
      %p70 = scmp.ne.s32.totalorder %s55, %s69
      %p71 = scmp.eq.s32.totalorder %s24, 0
      %p72 = por %p70, %p71
      %s74 = sadd.s32 %s73, 1
      %p77 = scmp.eq.s32.totalorder %s18, 1
      %p78 = scmp.ne.s32.totalorder %s73, %s75
      %p79 = scmp.eq.s32.totalorder %s18, 0
      %p80 = por %p78, %p79
      %p81 = scmp.ne.s32.totalorder %s73, %s75
      %p82 = scmp.eq.s32.totalorder %s23, 1
      %p83 = por %p81, %p82
      %p84 = scmp.ne.s32.totalorder %s75, %s76
      %p85 = scmp.eq.s32.totalorder %s23, 0
      %p86 = por %p84, %p85
      %p87 = scmp.ne.s32.totalorder %s75, %s76
      %p88 = scmp.eq.s32.totalorder %s24, 1
      %p89 = por %p87, %p88
      %p91 = scmp.ne.s32.totalorder %s76, %s90
      %p92 = scmp.eq.s32.totalorder %s24, 0
      %p93 = por %p91, %p92
      %s95 = sadd.s32 %s94, 1
      %p98 = scmp.eq.s32.totalorder %s18, 1
      %p99 = scmp.ne.s32.totalorder %s94, %s96
      %p100 = scmp.eq.s32.totalorder %s18, 0
      %p101 = por %p99, %p100
      %p102 = scmp.ne.s32.totalorder %s94, %s96
      %p103 = scmp.eq.s32.totalorder %s23, 1
      %p104 = por %p102, %p103
      %p105 = scmp.ne.s32.totalorder %s96, %s97
      %p106 = scmp.eq.s32.totalorder %s23, 0
      %p107 = por %p105, %p106
      %p108 = scmp.ne.s32.totalorder %s96, %s97
      %p109 = scmp.eq.s32.totalorder %s24, 1
      %p110 = por %p108, %p109
      %p112 = scmp.ne.s32.totalorder %s97, %s111
      %p113 = scmp.eq.s32.totalorder %s24, 0
      %p114 = por %p112, %p113
      %s116 = sadd.s32 %s115, 1
      %p119 = scmp.eq.s32.totalorder %s18, 1
      %p120 = scmp.ne.s32.totalorder %s115, %s117
      %p121 = scmp.eq.s32.totalorder %s18, 0
      %p122 = por %p120, %p121
      %p123 = scmp.ne.s32.totalorder %s115, %s117
      %p124 = scmp.eq.s32.totalorder %s23, 1
      %p125 = por %p123, %p124
      %p126 = scmp.ne.s32.totalorder %s117, %s118
      %p127 = scmp.eq.s32.totalorder %s23, 0
      %p128 = por %p126, %p127
      %p129 = scmp.ne.s32.totalorder %s117, %s118
      %p130 = scmp.eq.s32.totalorder %s24, 1
      %p131 = por %p129, %p130
      %p133 = scmp.ne.s32.totalorder %s118, %s132
      %p134 = scmp.eq.s32.totalorder %s24, 0
      %p135 = por %p133, %p134
      %s137 = sadd.s32 %s136, 1
      %p140 = scmp.eq.s32.totalorder %s18, 1
      %p141 = scmp.ne.s32.totalorder %s136, %s138
      %p142 = scmp.eq.s32.totalorder %s18, 0
      %p143 = por %p141, %p142
      %p144 = scmp.ne.s32.totalorder %s136, %s138
      %p145 = scmp.eq.s32.totalorder %s23, 1
      %p146 = por %p144, %p145
      %p147 = scmp.ne.s32.totalorder %s138, %s139
      %p148 = scmp.eq.s32.totalorder %s23, 0
      %p149 = por %p147, %p148
      %p150 = scmp.ne.s32.totalorder %s138, %s139
      %p151 = scmp.eq.s32.totalorder %s24, 1
      %p152 = por %p150, %p151
      %p154 = scmp.ne.s32.totalorder %s139, %s153
      %p155 = scmp.eq.s32.totalorder %s24, 0
      %p156 = por %p154, %p155
      %s158 = sadd.s32 %s157, 1
      %p161 = scmp.eq.s32.totalorder %s18, 1
      %p162 = scmp.ne.s32.totalorder %s157, %s159
      %p163 = scmp.eq.s32.totalorder %s18, 0
      %p164 = por %p162, %p163
      %p165 = scmp.ne.s32.totalorder %s157, %s159
      %p166 = scmp.eq.s32.totalorder %s23, 1
      %p167 = por %p165, %p166
      %p168 = scmp.ne.s32.totalorder %s159, %s160
      %p169 = scmp.eq.s32.totalorder %s23, 0
      %p170 = por %p168, %p169
      %p171 = scmp.ne.s32.totalorder %s159, %s160
      %p172 = scmp.eq.s32.totalorder %s24, 1
      %p173 = por %p171, %p172
      %p175 = scmp.ne.s32.totalorder %s160, %s174
      %p176 = scmp.eq.s32.totalorder %s24, 0
      %p177 = por %p175, %p176
      %s178 = ssub.s32 %s18, %s25
      %p179 = scmp.eq.s32.totalorder %s178, 0
      %s181 = sadd.s32 %s180, 1
      %s182 = scalar_select %p179, %s180, %s181
      %p185 = pneg %p179
      %p186 = scmp.eq.s32.totalorder %s18, 1
      %p187 = por %p185, %p186
      %p188 = scmp.ne.s32.totalorder %s180, %s183
      %p189 = scmp.eq.s32.totalorder %s18, 0
      %p190 = por %p188, %p189
      %p191 = scmp.ne.s32.totalorder %s180, %s183
      %p192 = scmp.eq.s32.totalorder %s23, 1
      %p193 = por %p191, %p192
      %p194 = scmp.ne.s32.totalorder %s183, %s184
      %p195 = scmp.eq.s32.totalorder %s23, 0
      %p196 = por %p194, %p195
      %p197 = scmp.ne.s32.totalorder %s183, %s184
      %p198 = scmp.eq.s32.totalorder %s24, 1
      %p199 = por %p197, %p198
      %p201 = scmp.ne.s32.totalorder %s184, %s200
      %p202 = scmp.eq.s32.totalorder %s24, 0
      %p203 = por %p201, %p202
      %p204 = scmp.le.s32.totalorder 1, %s18
      %p205 = scmp.lt.s32.totalorder %s18, 3
      %p206 = pnand %p204, %p205
      %p207 = pneg %p206
      // Predicated region
      $region9: #{tpu_custom_call.1} parent=5 // pred_check
        _
      $region10: #{tpu_custom_call.1} parent=5 // pred_check_branch
        %209 = sbr.rel (%p206) target = $region12
      $region11: #{tpu_custom_call.1} parent=5 // pred_region
        %s210 = ssub.s32 %s18, 1
        // Predicated region
        $region13: #{tpu_custom_call.1} parent=11 // pred_check
          %p211 = pneg %p65
        $region14: #{tpu_custom_call.1} parent=11 // pred_check_branch
          %213 = sbr.rel (%p211) target = $region16
        $region15: #{tpu_custom_call.1} parent=11 // pred_region
          _
        $region16: #{tpu_custom_call.1} parent=11 // pred_fallthru
          _
        // Predicated region
        $region17: #{tpu_custom_call.1} parent=11 // pred_check
          %p214 = pneg %p86
        $region18: #{tpu_custom_call.1} parent=11 // pred_check_branch
          %216 = sbr.rel (%p214) target = $region20
        $region19: #{tpu_custom_call.1} parent=11 // pred_region
          _
        $region20: #{tpu_custom_call.1} parent=11 // pred_fallthru
          _
        // Predicated region
        $region21: #{tpu_custom_call.1} parent=11 // pred_check
          %p217 = pneg %p107
        $region22: #{tpu_custom_call.1} parent=11 // pred_check_branch
          %219 = sbr.rel (%p217) target = $region24
        $region23: #{tpu_custom_call.1} parent=11 // pred_region
          _
        $region24: #{tpu_custom_call.1} parent=11 // pred_fallthru
          _
        // Predicated region
        $region25: #{tpu_custom_call.1} parent=11 // pred_check
          %p220 = pneg %p128
        $region26: #{tpu_custom_call.1} parent=11 // pred_check_branch
          %222 = sbr.rel (%p220) target = $region28
        $region27: #{tpu_custom_call.1} parent=11 // pred_region
          _
        $region28: #{tpu_custom_call.1} parent=11 // pred_fallthru
          _
        // Predicated region
        $region29: #{tpu_custom_call.1} parent=11 // pred_check
          %p223 = pneg %p149
        $region30: #{tpu_custom_call.1} parent=11 // pred_check_branch
          %225 = sbr.rel (%p223) target = $region32
        $region31: #{tpu_custom_call.1} parent=11 // pred_region
          _
        $region32: #{tpu_custom_call.1} parent=11 // pred_fallthru
          _
        // Predicated region
        $region33: #{tpu_custom_call.1} parent=11 // pred_check
          %p226 = pneg %p170
        $region34: #{tpu_custom_call.1} parent=11 // pred_check_branch
          %228 = sbr.rel (%p226) target = $region36
        $region35: #{tpu_custom_call.1} parent=11 // pred_region
          _
        $region36: #{tpu_custom_call.1} parent=11 // pred_fallthru
          _
      $region12: #{tpu_custom_call.1} parent=5 // pred_fallthru
        _
      %p229 = scmp.lt.s32.totalorder %s18, 2
      // Predicated region
      $region37: #{tpu_custom_call.1} parent=5 // pred_check
        %p230 = pneg %p229
      $region38: #{tpu_custom_call.1} parent=5 // pred_check_branch
        %232 = sbr.rel (%p230) target = $region40
      $region39: #{tpu_custom_call.1} parent=5 // pred_region
        // Predicated region
        $region41: #{tpu_custom_call.1} parent=39 // pred_check
          %p233 = pneg %p38
        $region42: #{tpu_custom_call.1} parent=39 // pred_check_branch
          %235 = sbr.rel (%p233) target = $region44
        $region43: #{tpu_custom_call.1} parent=39 // pred_region
          %s236 = smul.u32 2, %s18
          %p237 = scmp.lt.s32.totalorder %s236, 3
          %s238 = scalar_select %p237, %s236, 3
          %s239 = smul.addr %s238, 2
          %s240 = scalar_lea.vmem %s0, %s239
          %s241 = smul.u32 2, %s18
        $region44: #{tpu_custom_call.1} parent=39 // pred_fallthru
          _
      $region40: #{tpu_custom_call.1} parent=5 // pred_fallthru
        _
      %p242 = scmp.le.s32.totalorder 1, %s18
      %p243 = scmp.lt.s32.totalorder %s18, 3
      %p244 = pnand %p242, %p243
      %p245 = pneg %p244
      // Predicated region
      $region45: #{tpu_custom_call.1} parent=5 // pred_check
        _
      $region46: #{tpu_custom_call.1} parent=5 // pred_check_branch
        %247 = sbr.rel (%p244) target = $region48
      $region47: #{tpu_custom_call.1} parent=5 // pred_region
        %s248 = ssub.s32 %s18, 1
        %s249 = smul.u32 2, %s23
        %p250 = scmp.lt.s32.totalorder %s249, 3
        %s251 = scalar_select %p250, %s249, 3
        %s252 = smul.addr %s251, 2
        %s253 = scalar_lea.vmem %s0, %s252
        %p254 = pneg %p44
        %p255 = pneg %p41
        %p256 = pneg %p65
        %p257 = pneg %p62
        %p258 = pneg %p86
        %p259 = pneg %p83
        %p260 = pneg %p107
        %p261 = pneg %p104
        %p262 = pneg %p128
        %p263 = pneg %p125
        %p264 = pneg %p149
        %p265 = pneg %p146
        %p266 = pneg %p170
        %p267 = pneg %p167
        %p268 = pneg %p196
        %p269 = pneg %p193
        %s270 = sand.u32 %s183, 1
        %s271 = scalar_lea.sflag [#allocation4], %s270
        %s272 = sand.u32 %s183, 1
        %s273 = smul.addr %s272, 2
        %s274 = scalar_lea.vmem [#allocation3], %s273
        %s275 = smul.u32 2, %s23
        %p276 = scmp.lt.s32.totalorder %s275, 3
        %s277 = scalar_select %p276, %s275, 3
        %s278 = smul.addr %s277, 2
        %s279 = scalar_lea.vmem %s0, %s278
        %s280 = smul.u32 2, %s23
        %s281 = smul.u32 2, %s23
        %v282 = vld [vmem:[%s1] sm:$0xff]
        %v283 = vld [vmem:[%s1 + $0x8] sm:$0xff]
        %v284 = vld [vmem:[%s1 + $0x10] sm:$0xff]
        %v285 = vld [vmem:[%s1 + $0x18] sm:$0xff]
        %v286 = vld [vmem:[%s2] sm:$0xff]
        %v287 = vld [vmem:[%s2 + $0x8] sm:$0xff]
        %v288 = vld [vmem:[%s2 + $0x10] sm:$0xff]
        %v289 = vld [vmem:[%s2 + $0x18] sm:$0xff]
        %v290 = vld [vmem:[%s3] sm:$0xff]
        %v291 = vld [vmem:[%s3 + $0x8] sm:$0xff]
        %v292 = vld [vmem:[%s4] sm:$0xff]
        %v293 = vld [vmem:[%s4 + $0x8] sm:$0xff]
        %v294 = vld [vmem:[%s5] sm:$0x1]
        %v295 = vld [vmem:[#allocation2] sm:$0x1]
        loop: start=0, step=1, limit=2
        $region49: #{tpu_custom_call.1} parent=47 // loop_pre_header
          _
        $region50: #{tpu_custom_call.1} parent=47 // loop_header
          %s297 = sphi 0, %s301
          %p298 = scmp.ge.s32.totalorder %s297, 2
        $region51: #{tpu_custom_call.1} parent=47 // loop_header_branch
          %300 = sbr.rel (%p298) target = $region55
        $region52: #{tpu_custom_call.1} parent=47 // loop_body
          %s302 = smul.u32 %s297, 128
          %s303 = sshra.s32 %s302, 7
          %s304 = sand.u32 %s302, 127
          %s305 = smul.addr %s303, 2
          %s306 = scalar_lea.vmem %s279, %s305
          %v307 = vld [vmem:[%s306] sm:$0x3]
          %309 = vset.pattern.permute.xlu0 0
          %310 = vperm.xlu0 %309, %v286
          %v311 = vpop.permute.xlu0 %310
          %314 = vset.pattern.permute.xlu0 0
          %315 = vperm.xlu0 %314, %v287
          %v316 = vpop.permute.xlu0 %315
          %319 = vset.pattern.permute.xlu0 0
          %320 = vperm.xlu0 %319, %v288
          %v321 = vpop.permute.xlu0 %320
          %324 = vset.pattern.permute.xlu0 0
          %325 = vperm.xlu0 %324, %v289
          %v326 = vpop.permute.xlu0 %325
          %vm328 = vcmask 15360
          %v330 = vsel %vm328, %v282, 0
          %v333 = vsel %vm328, %v283, 0
          %v336 = vsel %vm328, %v284, 0
          %v339 = vsel %vm328, %v285, 0
          %vm341 = vcmask 1041408
          %v343 = vsel %vm341, %v307, 0
          %345 = vmatprep.subr.mxu0 0.0
          %346 = vmatpush1.msra.mxu0 %v343
          %347 = vmatprep.subr.mxu0 0.0
          %348 = vmatpush1.msra.mxu0 0.0
          %349 = vmatprep.subr.mxu0 0.0
          %350 = vmatpush1.msra.mxu0 0.0
          %351 = vmatprep.subr.mxu0 0.0
          %352 = vmatpush1.msra.mxu0 0.0
          %353 = vmatprep.subr.mxu0 0.0
          %354 = vmatpush1.msra.mxu0 0.0
          %355 = vmatprep.subr.mxu0 0.0
          %356 = vmatpush1.msra.mxu0 0.0
          %357 = vmatprep.subr.mxu0 0.0
          %358 = vmatpush1.msra.mxu0 0.0
          %359 = vmatprep.subr.mxu0 0.0
          %360 = vmatpush1.msra.mxu0 0.0
          %361 = vmatprep.subr.mxu0 0.0
          %362 = vmatpush1.msra.mxu0 0.0
          %363 = vmatprep.subr.mxu0 0.0
          %364 = vmatpush1.msra.mxu0 0.0
          %365 = vmatprep.subr.mxu0 0.0
          %366 = vmatpush1.msra.mxu0 0.0
          %367 = vmatprep.subr.mxu0 0.0
          %368 = vmatpush1.msra.mxu0 0.0
          %369 = vmatprep.subr.mxu0 0.0
          %370 = vmatpush1.msra.mxu0 0.0
          %371 = vmatprep.subr.mxu0 0.0
          %372 = vmatpush1.msra.mxu0 0.0
          %373 = vmatprep.subr.mxu0 0.0
          %374 = vmatpush1.msra.mxu0 0.0
          %375 = vmatprep.subr.mxu0 0.0
          %376 = vmatpush1.msra.mxu0 0.0
          %377 = vmatprep.subr.mxu0 0.0
          %378 = vmatpush1.msra.mxu0 0.0
          %379 = vmatprep.subr.mxu0 0.0
          %380 = vmatpush1.msra.mxu0 0.0
          %381 = vmatprep.subr.mxu0 0.0
          %382 = vmatpush1.msra.mxu0 0.0
          %383 = vmatprep.subr.mxu0 0.0
          %384 = vmatpush1.msra.mxu0 0.0
          %385 = vmatprep.subr.mxu0 0.0
          %386 = vmatpush1.msra.mxu0 0.0
          %387 = vmatprep.subr.mxu0 0.0
          %388 = vmatpush1.msra.mxu0 0.0
          %389 = vmatprep.subr.mxu0 0.0
          %390 = vmatpush1.msra.mxu0 0.0
          %391 = vmatprep.subr.mxu0 0.0
          %392 = vmatpush1.msra.mxu0 0.0
          %393 = vmatprep.subr.mxu0 0.0
          %394 = vmatpush1.msra.mxu0 0.0
          %395 = vmatprep.subr.mxu0 0.0
          %396 = vmatpush1.msra.mxu0 0.0
          %397 = vmatprep.subr.mxu0 0.0
          %398 = vmatpush1.msra.mxu0 0.0
          %399 = vmatprep.subr.mxu0 0.0
          %400 = vmatpush1.msra.mxu0 0.0
          %401 = vmatprep.subr.mxu0 0.0
          %402 = vmatpush1.msra.mxu0 0.0
          %403 = vmatprep.subr.mxu0 0.0
          %404 = vmatpush1.msra.mxu0 0.0
          %405 = vmatprep.subr.mxu0 0.0
          %406 = vmatpush1.msra.mxu0 0.0
          %407 = vmatprep.subr.mxu0 0.0
          %408 = vmatpush1.msra.mxu0 0.0
          %409 = vmatprep.mubr.f32.mxu0 0.0
          %410 = vmatmul.mubr.f32.gmra.mrb[0].mxu0 %v330
          %v411 = vpop.f32.mrb[0].mxu0
          %v412 = vadd.f32 %v311, %v411
          %v413 = vpop.f32.mrb[0].mxu0
          %414 = vmatprep.mubr.f32.mxu0 0.0
          %415 = vmatmul.mubr.f32.gmra.mrb[0].mxu0 %v333
          %v416 = vpop.f32.mrb[0].mxu0
          %v417 = vadd.f32 %v316, %v416
          %v418 = vpop.f32.mrb[0].mxu0
          %419 = vmatprep.mubr.f32.mxu0 0.0
          %420 = vmatmul.mubr.f32.gmra.mrb[0].mxu0 %v336
          %v421 = vpop.f32.mrb[0].mxu0
          %v422 = vadd.f32 %v321, %v421
          %v423 = vpop.f32.mrb[0].mxu0
          %424 = vmatprep.mubr.f32.mxu0 0.0
          %425 = vmatmul.mubr.f32.gmra.mrb[0].mxu0 %v339
          %v426 = vpop.f32.mrb[0].mxu0
          %v427 = vadd.f32 %v326, %v426
          %v428 = vpop.f32.mrb[0].mxu0
          %429 = vdwg.mxu0
          %v430 = vmax.f32 %v412, 0.0
          %v431 = vmax.f32 %v417, 0.0
          %v432 = vmax.f32 %v422, 0.0
          %v433 = vmax.f32 %v427, 0.0
          %435 = vset.pattern.permute.xlu0 0
          %436 = vperm.xlu0 %435, %v292
          %v437 = vpop.permute.xlu0 %436
          %440 = vset.pattern.permute.xlu0 0
          %441 = vperm.xlu0 %440, %v293
          %v442 = vpop.permute.xlu0 %441
          %vm444 = vcmask 261120
          %v446 = vsel %vm444, %v290, 0
          %v449 = vsel %vm444, %v291, 0
          %451 = vmatprep.subr.mxu0 0.0
          %452 = vmatpush1.msra.mxu0 %v430
          %453 = vmatprep.subr.mxu0 0.0
          %454 = vmatpush1.msra.mxu0 %v431
          %455 = vmatprep.subr.mxu0 0.0
          %456 = vmatpush1.msra.mxu0 %v432
          %457 = vmatprep.subr.mxu0 0.0
          %458 = vmatpush1.msra.mxu0 %v433
          %459 = vmatprep.subr.mxu0 0.0
          %460 = vmatpush1.msra.mxu0 0.0
          %461 = vmatprep.subr.mxu0 0.0
          %462 = vmatpush1.msra.mxu0 0.0
          %463 = vmatprep.subr.mxu0 0.0
          %464 = vmatpush1.msra.mxu0 0.0
          %465 = vmatprep.subr.mxu0 0.0
          %466 = vmatpush1.msra.mxu0 0.0
          %467 = vmatprep.subr.mxu0 0.0
          %468 = vmatpush1.msra.mxu0 0.0
          %469 = vmatprep.subr.mxu0 0.0
          %470 = vmatpush1.msra.mxu0 0.0
          %471 = vmatprep.subr.mxu0 0.0
          %472 = vmatpush1.msra.mxu0 0.0
          %473 = vmatprep.subr.mxu0 0.0
          %474 = vmatpush1.msra.mxu0 0.0
          %475 = vmatprep.subr.mxu0 0.0
          %476 = vmatpush1.msra.mxu0 0.0
          %477 = vmatprep.subr.mxu0 0.0
          %478 = vmatpush1.msra.mxu0 0.0
          %479 = vmatprep.subr.mxu0 0.0
          %480 = vmatpush1.msra.mxu0 0.0
          %481 = vmatprep.subr.mxu0 0.0
          %482 = vmatpush1.msra.mxu0 0.0
          %483 = vmatprep.subr.mxu0 0.0
          %484 = vmatpush1.msra.mxu0 0.0
          %485 = vmatprep.subr.mxu0 0.0
          %486 = vmatpush1.msra.mxu0 0.0
          %487 = vmatprep.subr.mxu0 0.0
          %488 = vmatpush1.msra.mxu0 0.0
          %489 = vmatprep.subr.mxu0 0.0
          %490 = vmatpush1.msra.mxu0 0.0
          %491 = vmatprep.subr.mxu0 0.0
          %492 = vmatpush1.msra.mxu0 0.0
          %493 = vmatprep.subr.mxu0 0.0
          %494 = vmatpush1.msra.mxu0 0.0
          %495 = vmatprep.subr.mxu0 0.0
          %496 = vmatpush1.msra.mxu0 0.0
          %497 = vmatprep.subr.mxu0 0.0
          %498 = vmatpush1.msra.mxu0 0.0
          %499 = vmatprep.subr.mxu0 0.0
          %500 = vmatpush1.msra.mxu0 0.0
          %501 = vmatprep.subr.mxu0 0.0
          %502 = vmatpush1.msra.mxu0 0.0
          %503 = vmatprep.subr.mxu0 0.0
          %504 = vmatpush1.msra.mxu0 0.0
          %505 = vmatprep.subr.mxu0 0.0
          %506 = vmatpush1.msra.mxu0 0.0
          %507 = vmatprep.subr.mxu0 0.0
          %508 = vmatpush1.msra.mxu0 0.0
          %509 = vmatprep.subr.mxu0 0.0
          %510 = vmatpush1.msra.mxu0 0.0
          %511 = vmatprep.subr.mxu0 0.0
          %512 = vmatpush1.msra.mxu0 0.0
          %513 = vmatprep.subr.mxu0 0.0
          %514 = vmatpush1.msra.mxu0 0.0
          %515 = vmatprep.mubr.f32.mxu0 0.0
          %516 = vmatmul.mubr.f32.gmra.mrb[0].mxu0 %v446
          %v517 = vpop.f32.mrb[0].mxu0
          %v518 = vadd.f32 %v437, %v517
          %v519 = vpop.f32.mrb[0].mxu0
          %520 = vmatprep.mubr.f32.mxu0 0.0
          %521 = vmatmul.mubr.f32.gmra.mrb[0].mxu0 %v449
          %v522 = vpop.f32.mrb[0].mxu0
          %v523 = vadd.f32 %v442, %v522
          %v524 = vpop.f32.mrb[0].mxu0
          %525 = vdwg.mxu0
          %v526 = vmax.f32 %v518, 0.0
          %v527 = vmax.f32 %v523, 0.0
          %529 = vset.pattern.permute.xlu0 0
          %530 = vperm.xlu0 %529, %v295
          %v531 = vpop.permute.xlu0 %530
          %v533 = vlaneseq
          %v534 = vshrl.u32 %v533, 7
          %v535 = vsub.s32 0, %v534
          %v536 = vrot.slane %v531, %v535
          %vm537 = vcmask 130048
          %v539 = vsel %vm537, %v294, 0
          %541 = vmatprep.subr.mxu0 0.0
          %542 = vmatpush1.msra.mxu0 %v526
          %543 = vmatprep.subr.mxu0 0.0
          %544 = vmatpush1.msra.mxu0 %v527
          %545 = vmatprep.subr.mxu0 0.0
          %546 = vmatpush1.msra.mxu0 0.0
          %547 = vmatprep.subr.mxu0 0.0
          %548 = vmatpush1.msra.mxu0 0.0
          %549 = vmatprep.subr.mxu0 0.0
          %550 = vmatpush1.msra.mxu0 0.0
          %551 = vmatprep.subr.mxu0 0.0
          %552 = vmatpush1.msra.mxu0 0.0
          %553 = vmatprep.subr.mxu0 0.0
          %554 = vmatpush1.msra.mxu0 0.0
          %555 = vmatprep.subr.mxu0 0.0
          %556 = vmatpush1.msra.mxu0 0.0
          %557 = vmatprep.subr.mxu0 0.0
          %558 = vmatpush1.msra.mxu0 0.0
          %559 = vmatprep.subr.mxu0 0.0
          %560 = vmatpush1.msra.mxu0 0.0
          %561 = vmatprep.subr.mxu0 0.0
          %562 = vmatpush1.msra.mxu0 0.0
          %563 = vmatprep.subr.mxu0 0.0
          %564 = vmatpush1.msra.mxu0 0.0
          %565 = vmatprep.subr.mxu0 0.0
          %566 = vmatpush1.msra.mxu0 0.0
          %567 = vmatprep.subr.mxu0 0.0
          %568 = vmatpush1.msra.mxu0 0.0
          %569 = vmatprep.subr.mxu0 0.0
          %570 = vmatpush1.msra.mxu0 0.0
          %571 = vmatprep.subr.mxu0 0.0
          %572 = vmatpush1.msra.mxu0 0.0
          %573 = vmatprep.subr.mxu0 0.0
          %574 = vmatpush1.msra.mxu0 0.0
          %575 = vmatprep.subr.mxu0 0.0
          %576 = vmatpush1.msra.mxu0 0.0
          %577 = vmatprep.subr.mxu0 0.0
          %578 = vmatpush1.msra.mxu0 0.0
          %579 = vmatprep.subr.mxu0 0.0
          %580 = vmatpush1.msra.mxu0 0.0
          %581 = vmatprep.subr.mxu0 0.0
          %582 = vmatpush1.msra.mxu0 0.0
          %583 = vmatprep.subr.mxu0 0.0
          %584 = vmatpush1.msra.mxu0 0.0
          %585 = vmatprep.subr.mxu0 0.0
          %586 = vmatpush1.msra.mxu0 0.0
          %587 = vmatprep.subr.mxu0 0.0
          %588 = vmatpush1.msra.mxu0 0.0
          %589 = vmatprep.subr.mxu0 0.0
          %590 = vmatpush1.msra.mxu0 0.0
          %591 = vmatprep.subr.mxu0 0.0
          %592 = vmatpush1.msra.mxu0 0.0
          %593 = vmatprep.subr.mxu0 0.0
          %594 = vmatpush1.msra.mxu0 0.0
          %595 = vmatprep.subr.mxu0 0.0
          %596 = vmatpush1.msra.mxu0 0.0
          %597 = vmatprep.subr.mxu0 0.0
          %598 = vmatpush1.msra.mxu0 0.0
          %599 = vmatprep.subr.mxu0 0.0
          %600 = vmatpush1.msra.mxu0 0.0
          %601 = vmatprep.subr.mxu0 0.0
          %602 = vmatpush1.msra.mxu0 0.0
          %603 = vmatprep.subr.mxu0 0.0
          %604 = vmatpush1.msra.mxu0 0.0
          %605 = vmatprep.mubr.f32.mxu0 0.0
          %606 = vmatmul.mubr.f32.gmra.mrb[0].mxu0 %v539
          %v607 = vpop.f32.mrb[0].mxu0
          %v608 = vadd.f32 %v536, %v607
          %v609 = vpop.f32.mrb[0].mxu0
          %610 = vdwg.mxu0
          %s611 = scalar_lea.vmem %s274, %s303 [#allocation3]
          %v612 = vlaneseq
          %vm613 = vcmp.ge.s32.totalorder %v612, 0
          %vm614 = vcmp.lt.s32.totalorder %v612, 128
          %vm615 = vmand %vm613, %vm614
          %616 = vst.msk [vmem:[%s611] sm:$0x1] %vm615, %v608
        $region53: #{tpu_custom_call.1} parent=47 // loop_footer
          %s301 = sadd.s32 1, %s297
        $region54: #{tpu_custom_call.1} parent=47 // loop_footer_branch
          %296 = sbr.rel target = $region50
        $region55: #{tpu_custom_call.1} parent=47 // loop_exit
          _
        %s617 = sand.u32 %s183, 1
        %s618 = scalar_lea.sflag [#allocation4], %s617
        %s619 = sand.u32 %s183, 1
        %s620 = smul.addr %s619, 2
        %s621 = scalar_lea.vmem [#allocation3], %s620
        // Predicated region
        $region56: #{tpu_custom_call.1} parent=47 // pred_check
          %p622 = pneg %p193
        $region57: #{tpu_custom_call.1} parent=47 // pred_check_branch
          %624 = sbr.rel (%p622) target = $region59
        $region58: #{tpu_custom_call.1} parent=47 // pred_region
          %s625 = smul.u32 2, %s23
          %s627 = ssub.s32 32, 32
          %628 = vsyncadd %s618, %s627
          %s629 = smul.addr %s625, 16
          %s630 = scalar_lea.hbm %s7, %s629
          %s632 = sshll.u32 %s621, 4
          %s633 = int_to_ptr.vmem [resolvable:$true] %s632
          %635 = dma.vmem_to_hbm [thread:$0]  %s633, 32, %s630, %s618
        $region59: #{tpu_custom_call.1} parent=47 // pred_fallthru
          _
      $region48: #{tpu_custom_call.1} parent=5 // pred_fallthru
        _
      %p636 = scmp.le.s32.totalorder 2, %s18
      // Predicated region
      $region60: #{tpu_custom_call.1} parent=5 // pred_check
        %p637 = pneg %p636
      $region61: #{tpu_custom_call.1} parent=5 // pred_check_branch
        %639 = sbr.rel (%p637) target = $region63
      $region62: #{tpu_custom_call.1} parent=5 // pred_region
        %s640 = ssub.s32 %s18, 2
        // Predicated region
        $region64: #{tpu_custom_call.1} parent=62 // pred_check
          %p641 = pneg %p199
        $region65: #{tpu_custom_call.1} parent=62 // pred_check_branch
          %643 = sbr.rel (%p641) target = $region67
        $region66: #{tpu_custom_call.1} parent=62 // pred_region
          %s644 = sand.u32 %s184, 1
          %s645 = scalar_lea.sflag [#allocation4], %s644
          %s646 = sand.u32 %s184, 1
          %s647 = smul.addr %s646, 2
          %s648 = scalar_lea.vmem [#allocation3], %s647
          %649 = dma.done %s645, 32
        $region67: #{tpu_custom_call.1} parent=62 // pred_fallthru
          _
      $region63: #{tpu_custom_call.1} parent=5 // pred_fallthru
        _
    $region6: #{tpu_custom_call.1} parent=1 // loop_footer
      %s22 = sadd.s32 1, %s18
    $region7: #{tpu_custom_call.1} parent=1 // loop_footer_branch
      %17 = sbr.rel target = $region3
    $region8: #{tpu_custom_call.1} parent=1 // loop_exit
      _
    %650 = vsyncpa [#allocation4], 1
    %s651 = scalar_lea.sflag [#allocation4], 1
    %652 = vsyncpa %s651, 1

// kernel: tpu_custom_call.1
$region0: #{tpu_custom_call.1}
  #allocation0 [shape = 'u32[]', space=smem, size = 0x4, offset = 0x4, fixed_abs, tag = 'smem constant byte address 0x4 - core index']
  #allocation1 [shape = 'u32[144,128]{1,0:T(1,128)}', space=vmem, size = 0x12000, scoped, tag = 'internal scratch']
  #allocation2 [shape = 'f32[1,1]{1,0:T(1,128)S(1)}', space=vmem, size = 0x200, scoped, tag = 'scoped memory for tpu_custom_call.1']
  %s0 = inlined_call_operand.vmem [shape: f32[2,512], index: 0, kind: input, shape index: {}]
  %s1 = inlined_call_operand.vmem [shape: f32[32,2], index: 1, kind: input, shape index: {}]
  %s2 = inlined_call_operand.vmem [shape: f32[32,1], index: 2, kind: input, shape index: {}]
  %s3 = inlined_call_operand.vmem [shape: f32[16,32], index: 3, kind: input, shape index: {}]
  %s4 = inlined_call_operand.vmem [shape: f32[16,1], index: 4, kind: input, shape index: {}]
  %s5 = inlined_call_operand.vmem [shape: f32[1,16], index: 5, kind: input, shape index: {}]
  %s6 = inlined_call_operand.<no memory space> [shape: f32[1,1], index: 6, kind: input, shape index: {}]
  %s7 = inlined_call_operand.hbm [shape: f32[1,512], index: 7, kind: output, shape index: {}]
  %s8 = sld [smem:[#allocation0]]
  $region68: #{tpu_custom_call.1} parent=0
    _
  %s10 = ssub.s32 1, %s8
  %s11 = scalar_select 0, %s10, %s8
  %v12 = vstv %s6
  %13 = vst [vmem:[#allocation2] sm:$0x1] %v12
  $region1: #{tpu_custom_call.1} parent=0
    #allocation3 [shape = 'u8[2048]{0}', space=vmem, size = 0x800, scoped, tag = 'output window, operand 0']
    #allocation4 [shape = 's32[2]{0}', space=sflag, size = 0x8, scoped, tag = 'scoped memory for tpu_custom_call.1']
    %14 = vsyncpa [#allocation4], 0
    %s15 = scalar_lea.sflag [#allocation4], 1
    %16 = vsyncpa %s15, 0
    loop: start=0, step=1, limit=4
    $region2: #{tpu_custom_call.1} parent=1 // loop_pre_header
      _
    $region3: #{tpu_custom_call.1} parent=1 // loop_header
      %s18 = sphi 0, %s22
      %p19 = scmp.ge.s32.totalorder %s18, 4
      %s28 = sphi 0, %s30
      %s31 = sphi 0, %s28
      %s32 = sphi 0, %s31
      %s48 = sphi 0, %s32
      %s52 = sphi 0, %s52
      %s54 = sphi 0, %s52
      %s55 = sphi 0, %s54
      %s69 = sphi 0, %s55
      %s73 = sphi 0, %s73
      %s75 = sphi 0, %s73
      %s76 = sphi 0, %s75
      %s90 = sphi 0, %s76
      %s94 = sphi 0, %s94
      %s96 = sphi 0, %s94
      %s97 = sphi 0, %s96
      %s111 = sphi 0, %s97
      %s115 = sphi 0, %s115
      %s117 = sphi 0, %s115
      %s118 = sphi 0, %s117
      %s132 = sphi 0, %s118
      %s136 = sphi 0, %s136
      %s138 = sphi 0, %s136
      %s139 = sphi 0, %s138
      %s153 = sphi 0, %s139
      %s157 = sphi 0, %s157
      %s159 = sphi 0, %s157
      %s160 = sphi 0, %s159
      %s174 = sphi 0, %s160
      %s180 = sphi 0, %s182
      %s183 = sphi 0, %s180
      %s184 = sphi 0, %s183
      %s200 = sphi 0, %s184
    $region4: #{tpu_custom_call.1} parent=1 // loop_header_branch
      %21 = sbr.rel (%p19) target = $region8
    $region5: #{tpu_custom_call.1} parent=1 // loop_body
      %s23 = ssub.s32 %s18, 1
      %s24 = ssub.s32 %s18, 2
      %s25 = sadd.s32 %s18, 1
      %s26 = ssub.s32 %s18, %s25
      %p27 = scmp.eq.s32.totalorder %s26, 0
      %s29 = sadd.s32 %s28, 1
      %s30 = scalar_select %p27, %s28, %s29
      %p33 = pneg %p27
      %p34 = scmp.eq.s32.totalorder %s18, 1
      %p35 = por %p33, %p34
      %p36 = scmp.ne.s32.totalorder %s28, %s31
      %p37 = scmp.eq.s32.totalorder %s18, 0
      %p38 = por %p36, %p37
      %p39 = scmp.ne.s32.totalorder %s28, %s31
      %p40 = scmp.eq.s32.totalorder %s23, 1
      %p41 = por %p39, %p40
      %p42 = scmp.ne.s32.totalorder %s31, %s32
      %p43 = scmp.eq.s32.totalorder %s23, 0
      %p44 = por %p42, %p43
      %p45 = scmp.ne.s32.totalorder %s31, %s32
      %p46 = scmp.eq.s32.totalorder %s24, 1
      %p47 = por %p45, %p46
      %p49 = scmp.ne.s32.totalorder %s32, %s48
      %p50 = scmp.eq.s32.totalorder %s24, 0
      %p51 = por %p49, %p50
      %s53 = sadd.s32 %s52, 1
      %p56 = scmp.eq.s32.totalorder %s18, 1
      %p57 = scmp.ne.s32.totalorder %s52, %s54
      %p58 = scmp.eq.s32.totalorder %s18, 0
      %p59 = por %p57, %p58
      %p60 = scmp.ne.s32.totalorder %s52, %s54
      %p61 = scmp.eq.s32.totalorder %s23, 1
      %p62 = por %p60, %p61
      %p63 = scmp.ne.s32.totalorder %s54, %s55
      %p64 = scmp.eq.s32.totalorder %s23, 0
      %p65 = por %p63, %p64
      %p66 = scmp.ne.s32.totalorder %s54, %s55
      %p67 = scmp.eq.s32.totalorder %s24, 1
      %p68 = por %p66, %p67
      %p70 = scmp.ne.s32.totalorder %s55, %s69
      %p71 = scmp.eq.s32.totalorder %s24, 0
      %p72 = por %p70, %p71
      %s74 = sadd.s32 %s73, 1
      %p77 = scmp.eq.s32.totalorder %s18, 1
      %p78 = scmp.ne.s32.totalorder %s73, %s75
      %p79 = scmp.eq.s32.totalorder %s18, 0
      %p80 = por %p78, %p79
      %p81 = scmp.ne.s32.totalorder %s73, %s75
      %p82 = scmp.eq.s32.totalorder %s23, 1
      %p83 = por %p81, %p82
      %p84 = scmp.ne.s32.totalorder %s75, %s76
      %p85 = scmp.eq.s32.totalorder %s23, 0
      %p86 = por %p84, %p85
      %p87 = scmp.ne.s32.totalorder %s75, %s76
      %p88 = scmp.eq.s32.totalorder %s24, 1
      %p89 = por %p87, %p88
      %p91 = scmp.ne.s32.totalorder %s76, %s90
      %p92 = scmp.eq.s32.totalorder %s24, 0
      %p93 = por %p91, %p92
      %s95 = sadd.s32 %s94, 1
      %p98 = scmp.eq.s32.totalorder %s18, 1
      %p99 = scmp.ne.s32.totalorder %s94, %s96
      %p100 = scmp.eq.s32.totalorder %s18, 0
      %p101 = por %p99, %p100
      %p102 = scmp.ne.s32.totalorder %s94, %s96
      %p103 = scmp.eq.s32.totalorder %s23, 1
      %p104 = por %p102, %p103
      %p105 = scmp.ne.s32.totalorder %s96, %s97
      %p106 = scmp.eq.s32.totalorder %s23, 0
      %p107 = por %p105, %p106
      %p108 = scmp.ne.s32.totalorder %s96, %s97
      %p109 = scmp.eq.s32.totalorder %s24, 1
      %p110 = por %p108, %p109
      %p112 = scmp.ne.s32.totalorder %s97, %s111
      %p113 = scmp.eq.s32.totalorder %s24, 0
      %p114 = por %p112, %p113
      %s116 = sadd.s32 %s115, 1
      %p119 = scmp.eq.s32.totalorder %s18, 1
      %p120 = scmp.ne.s32.totalorder %s115, %s117
      %p121 = scmp.eq.s32.totalorder %s18, 0
      %p122 = por %p120, %p121
      %p123 = scmp.ne.s32.totalorder %s115, %s117
      %p124 = scmp.eq.s32.totalorder %s23, 1
      %p125 = por %p123, %p124
      %p126 = scmp.ne.s32.totalorder %s117, %s118
      %p127 = scmp.eq.s32.totalorder %s23, 0
      %p128 = por %p126, %p127
      %p129 = scmp.ne.s32.totalorder %s117, %s118
      %p130 = scmp.eq.s32.totalorder %s24, 1
      %p131 = por %p129, %p130
      %p133 = scmp.ne.s32.totalorder %s118, %s132
      %p134 = scmp.eq.s32.totalorder %s24, 0
      %p135 = por %p133, %p134
      %s137 = sadd.s32 %s136, 1
      %p140 = scmp.eq.s32.totalorder %s18, 1
      %p141 = scmp.ne.s32.totalorder %s136, %s138
      %p142 = scmp.eq.s32.totalorder %s18, 0
      %p143 = por %p141, %p142
      %p144 = scmp.ne.s32.totalorder %s136, %s138
      %p145 = scmp.eq.s32.totalorder %s23, 1
      %p146 = por %p144, %p145
      %p147 = scmp.ne.s32.totalorder %s138, %s139
      %p148 = scmp.eq.s32.totalorder %s23, 0
      %p149 = por %p147, %p148
      %p150 = scmp.ne.s32.totalorder %s138, %s139
      %p151 = scmp.eq.s32.totalorder %s24, 1
      %p152 = por %p150, %p151
      %p154 = scmp.ne.s32.totalorder %s139, %s153
      %p155 = scmp.eq.s32.totalorder %s24, 0
      %p156 = por %p154, %p155
      %s158 = sadd.s32 %s157, 1
      %p161 = scmp.eq.s32.totalorder %s18, 1
      %p162 = scmp.ne.s32.totalorder %s157, %s159
      %p163 = scmp.eq.s32.totalorder %s18, 0
      %p164 = por %p162, %p163
      %p165 = scmp.ne.s32.totalorder %s157, %s159
      %p166 = scmp.eq.s32.totalorder %s23, 1
      %p167 = por %p165, %p166
      %p168 = scmp.ne.s32.totalorder %s159, %s160
      %p169 = scmp.eq.s32.totalorder %s23, 0
      %p170 = por %p168, %p169
      %p171 = scmp.ne.s32.totalorder %s159, %s160
      %p172 = scmp.eq.s32.totalorder %s24, 1
      %p173 = por %p171, %p172
      %p175 = scmp.ne.s32.totalorder %s160, %s174
      %p176 = scmp.eq.s32.totalorder %s24, 0
      %p177 = por %p175, %p176
      %s178 = ssub.s32 %s18, %s25
      %p179 = scmp.eq.s32.totalorder %s178, 0
      %s181 = sadd.s32 %s180, 1
      %s182 = scalar_select %p179, %s180, %s181
      %p185 = pneg %p179
      %p186 = scmp.eq.s32.totalorder %s18, 1
      %p187 = por %p185, %p186
      %p188 = scmp.ne.s32.totalorder %s180, %s183
      %p189 = scmp.eq.s32.totalorder %s18, 0
      %p190 = por %p188, %p189
      %p191 = scmp.ne.s32.totalorder %s180, %s183
      %p192 = scmp.eq.s32.totalorder %s23, 1
      %p193 = por %p191, %p192
      %p194 = scmp.ne.s32.totalorder %s183, %s184
      %p195 = scmp.eq.s32.totalorder %s23, 0
      %p196 = por %p194, %p195
      %p197 = scmp.ne.s32.totalorder %s183, %s184
      %p198 = scmp.eq.s32.totalorder %s24, 1
      %p199 = por %p197, %p198
      %p201 = scmp.ne.s32.totalorder %s184, %s200
      %p202 = scmp.eq.s32.totalorder %s24, 0
      %p203 = por %p201, %p202
      %p204 = scmp.le.s32.totalorder 1, %s18
      %p205 = scmp.lt.s32.totalorder %s18, 3
      %p206 = pnand %p204, %p205
      %p207 = pneg %p206
      // Predicated region
      $region9: #{tpu_custom_call.1} parent=5 // pred_check
        _
      $region10: #{tpu_custom_call.1} parent=5 // pred_check_branch
        %209 = sbr.rel (%p206) target = $region12
      $region11: #{tpu_custom_call.1} parent=5 // pred_region
        %s210 = ssub.s32 %s18, 1
        // Predicated region
        $region13: #{tpu_custom_call.1} parent=11 // pred_check
          %p211 = pneg %p65
        $region14: #{tpu_custom_call.1} parent=11 // pred_check_branch
          %213 = sbr.rel (%p211) target = $region16
        $region15: #{tpu_custom_call.1} parent=11 // pred_region
          _
        $region16: #{tpu_custom_call.1} parent=11 // pred_fallthru
          _
        // Predicated region
        $region17: #{tpu_custom_call.1} parent=11 // pred_check
          %p214 = pneg %p86
        $region18: #{tpu_custom_call.1} parent=11 // pred_check_branch
          %216 = sbr.rel (%p214) target = $region20
        $region19: #{tpu_custom_call.1} parent=11 // pred_region
          _
        $region20: #{tpu_custom_call.1} parent=11 // pred_fallthru
          _
        // Predicated region
        $region21: #{tpu_custom_call.1} parent=11 // pred_check
          %p217 = pneg %p107
        $region22: #{tpu_custom_call.1} parent=11 // pred_check_branch
          %219 = sbr.rel (%p217) target = $region24
        $region23: #{tpu_custom_call.1} parent=11 // pred_region
          _
        $region24: #{tpu_custom_call.1} parent=11 // pred_fallthru
          _
        // Predicated region
        $region25: #{tpu_custom_call.1} parent=11 // pred_check
          %p220 = pneg %p128
        $region26: #{tpu_custom_call.1} parent=11 // pred_check_branch
          %222 = sbr.rel (%p220) target = $region28
        $region27: #{tpu_custom_call.1} parent=11 // pred_region
          _
        $region28: #{tpu_custom_call.1} parent=11 // pred_fallthru
          _
        // Predicated region
        $region29: #{tpu_custom_call.1} parent=11 // pred_check
          %p223 = pneg %p149
        $region30: #{tpu_custom_call.1} parent=11 // pred_check_branch
          %225 = sbr.rel (%p223) target = $region32
        $region31: #{tpu_custom_call.1} parent=11 // pred_region
          _
        $region32: #{tpu_custom_call.1} parent=11 // pred_fallthru
          _
        // Predicated region
        $region33: #{tpu_custom_call.1} parent=11 // pred_check
          %p226 = pneg %p170
        $region34: #{tpu_custom_call.1} parent=11 // pred_check_branch
          %228 = sbr.rel (%p226) target = $region36
        $region35: #{tpu_custom_call.1} parent=11 // pred_region
          _
        $region36: #{tpu_custom_call.1} parent=11 // pred_fallthru
          _
      $region12: #{tpu_custom_call.1} parent=5 // pred_fallthru
        _
      %p229 = scmp.lt.s32.totalorder %s18, 2
      // Predicated region
      $region37: #{tpu_custom_call.1} parent=5 // pred_check
        %p230 = pneg %p229
      $region38: #{tpu_custom_call.1} parent=5 // pred_check_branch
        %232 = sbr.rel (%p230) target = $region40
      $region39: #{tpu_custom_call.1} parent=5 // pred_region
        // Predicated region
        $region41: #{tpu_custom_call.1} parent=39 // pred_check
          %p233 = pneg %p38
        $region42: #{tpu_custom_call.1} parent=39 // pred_check_branch
          %235 = sbr.rel (%p233) target = $region44
        $region43: #{tpu_custom_call.1} parent=39 // pred_region
          %s236 = smul.u32 2, %s18
          %p237 = scmp.lt.s32.totalorder %s236, 3
          %s238 = scalar_select %p237, %s236, 3
          %s239 = smul.addr %s238, 2
          %s240 = scalar_lea.vmem %s0, %s239
          %s241 = smul.u32 2, %s18
        $region44: #{tpu_custom_call.1} parent=39 // pred_fallthru
          _
      $region40: #{tpu_custom_call.1} parent=5 // pred_fallthru
        _
      %p242 = scmp.le.s32.totalorder 1, %s18
      %p243 = scmp.lt.s32.totalorder %s18, 3
      %p244 = pnand %p242, %p243
      %p245 = pneg %p244
      // Predicated region
      $region45: #{tpu_custom_call.1} parent=5 // pred_check
        _
      $region46: #{tpu_custom_call.1} parent=5 // pred_check_branch
        %247 = sbr.rel (%p244) target = $region48
      $region47: #{tpu_custom_call.1} parent=5 // pred_region
        %s248 = ssub.s32 %s18, 1
        %s249 = smul.u32 2, %s23
        %p250 = scmp.lt.s32.totalorder %s249, 3
        %s251 = scalar_select %p250, %s249, 3
        %s252 = smul.addr %s251, 2
        %s253 = scalar_lea.vmem %s0, %s252
        %p254 = pneg %p44
        %p255 = pneg %p41
        %p256 = pneg %p65
        %p257 = pneg %p62
        %p258 = pneg %p86
        %p259 = pneg %p83
        %p260 = pneg %p107
        %p261 = pneg %p104
        %p262 = pneg %p128
        %p263 = pneg %p125
        %p264 = pneg %p149
        %p265 = pneg %p146
        %p266 = pneg %p170
        %p267 = pneg %p167
        %p268 = pneg %p196
        %p269 = pneg %p193
        %s270 = sand.u32 %s183, 1
        %s271 = scalar_lea.sflag [#allocation4], %s270
        %s272 = sand.u32 %s183, 1
        %s273 = smul.addr %s272, 2
        %s274 = scalar_lea.vmem [#allocation3], %s273
        %s275 = smul.u32 2, %s23
        %p276 = scmp.lt.s32.totalorder %s275, 3
        %s277 = scalar_select %p276, %s275, 3
        %s278 = smul.addr %s277, 2
        %s279 = scalar_lea.vmem %s0, %s278
        %s280 = smul.u32 2, %s23
        %s281 = smul.u32 2, %s23
        %v282 = vld [vmem:[%s1] sm:$0xff]
        %v283 = vld [vmem:[%s1 + $0x8] sm:$0xff]
        %v284 = vld [vmem:[%s1 + $0x10] sm:$0xff]
        %v285 = vld [vmem:[%s1 + $0x18] sm:$0xff]
        %v286 = vld [vmem:[%s2] sm:$0xff]
        %v287 = vld [vmem:[%s2 + $0x8] sm:$0xff]
        %v288 = vld [vmem:[%s2 + $0x10] sm:$0xff]
        %v289 = vld [vmem:[%s2 + $0x18] sm:$0xff]
        %v290 = vld [vmem:[%s3] sm:$0xff]
        %v291 = vld [vmem:[%s3 + $0x8] sm:$0xff]
        %v292 = vld [vmem:[%s4] sm:$0xff]
        %v293 = vld [vmem:[%s4 + $0x8] sm:$0xff]
        %v294 = vld [vmem:[%s5] sm:$0x1]
        %v295 = vld [vmem:[#allocation2] sm:$0x1]
        loop: start=0, step=1, limit=2
        $region49: #{tpu_custom_call.1} parent=47 // loop_pre_header
          _
        $region50: #{tpu_custom_call.1} parent=47 // loop_header
          %s297 = sphi 0, %s301
          %p298 = scmp.ge.s32.totalorder %s297, 2
        $region51: #{tpu_custom_call.1} parent=47 // loop_header_branch
          %300 = sbr.rel (%p298) target = $region55
        $region52: #{tpu_custom_call.1} parent=47 // loop_body
          %s302 = smul.u32 %s297, 128
          %s303 = sshra.s32 %s302, 7
          %s304 = sand.u32 %s302, 127
          %s305 = smul.addr %s303, 2
          %s306 = scalar_lea.vmem %s279, %s305
          %v307 = vld [vmem:[%s306] sm:$0x3]
          %309 = vset.pattern.permute.xlu0 0
          %310 = vperm.xlu0 %309, %v282
          %v311 = vpop.permute.xlu0 %310
          %314 = vset.pattern.permute.xlu0 0
          %315 = vperm.xlu0 %314, %v283
          %v316 = vpop.permute.xlu0 %315
          %319 = vset.pattern.permute.xlu0 0
          %320 = vperm.xlu0 %319, %v284
          %v321 = vpop.permute.xlu0 %320
          %324 = vset.pattern.permute.xlu0 0
          %325 = vperm.xlu0 %324, %v285
          %v326 = vpop.permute.xlu0 %325
          %v328 = vlaneseq
          %v329 = vshrl.u32 %v328, 7
          %v330 = vsub.s32 0, %v329
          %v331 = vrot.slane %v307, %v330
          %v332 = vmul.f32 %v311, %v331
          %v333 = vmul.f32 %v316, %v331
          %v334 = vmul.f32 %v321, %v331
          %v335 = vmul.f32 %v326, %v331
          %336 = vset.pattern.permute.xlu0 1
          %337 = vperm.xlu0 %336, %v282
          %v338 = vpop.permute.xlu0 %337
          %340 = vset.pattern.permute.xlu0 1
          %341 = vperm.xlu0 %340, %v283
          %v342 = vpop.permute.xlu0 %341
          %344 = vset.pattern.permute.xlu0 1
          %345 = vperm.xlu0 %344, %v284
          %v346 = vpop.permute.xlu0 %345
          %348 = vset.pattern.permute.xlu0 1
          %349 = vperm.xlu0 %348, %v285
          %v350 = vpop.permute.xlu0 %349
          %v352 = vlaneseq
          %v353 = vshrl.u32 %v352, 7
          %v354 = vsub.s32 1, %v353
          %v355 = vrot.slane %v307, %v354
          %v356 = vmul.f32 %v338, %v355
          %v357 = vmul.f32 %v342, %v355
          %v358 = vmul.f32 %v346, %v355
          %v359 = vmul.f32 %v350, %v355
          %v360 = vadd.f32 %v332, %v356
          %v361 = vadd.f32 %v333, %v357
          %v362 = vadd.f32 %v334, %v358
          %v363 = vadd.f32 %v335, %v359
          %365 = vset.pattern.permute.xlu0 0
          %366 = vperm.xlu0 %365, %v286
          %v367 = vpop.permute.xlu0 %366
          %370 = vset.pattern.permute.xlu0 0
          %371 = vperm.xlu0 %370, %v287
          %v372 = vpop.permute.xlu0 %371
          %375 = vset.pattern.permute.xlu0 0
          %376 = vperm.xlu0 %375, %v288
          %v377 = vpop.permute.xlu0 %376
          %380 = vset.pattern.permute.xlu0 0
          %381 = vperm.xlu0 %380, %v289
          %v382 = vpop.permute.xlu0 %381
          %v384 = vadd.f32 %v360, %v367
          %v385 = vadd.f32 %v361, %v372
          %v386 = vadd.f32 %v362, %v377
          %v387 = vadd.f32 %v363, %v382
          %v388 = vmax.f32 %v384, 0.0
          %v389 = vmax.f32 %v385, 0.0
          %v390 = vmax.f32 %v386, 0.0
          %v391 = vmax.f32 %v387, 0.0
          %393 = vset.pattern.permute.xlu0 0
          %394 = vperm.xlu0 %393, %v292
          %v395 = vpop.permute.xlu0 %394
          %398 = vset.pattern.permute.xlu0 0
          %399 = vperm.xlu0 %398, %v293
          %v400 = vpop.permute.xlu0 %399
          %vm402 = vcmask 261120
          %v404 = vsel %vm402, %v290, 0
          %v407 = vsel %vm402, %v291, 0
          %409 = vmatprep.subr.mxu0 0.0
          %410 = vmatpush1.msra.mxu0 %v388
          %411 = vmatprep.subr.mxu0 0.0
          %412 = vmatpush1.msra.mxu0 %v389
          %413 = vmatprep.subr.mxu0 0.0
          %414 = vmatpush1.msra.mxu0 %v390
          %415 = vmatprep.subr.mxu0 0.0
          %416 = vmatpush1.msra.mxu0 %v391
          %417 = vmatprep.subr.mxu0 0.0
          %418 = vmatpush1.msra.mxu0 0.0
          %419 = vmatprep.subr.mxu0 0.0
          %420 = vmatpush1.msra.mxu0 0.0
          %421 = vmatprep.subr.mxu0 0.0
          %422 = vmatpush1.msra.mxu0 0.0
          %423 = vmatprep.subr.mxu0 0.0
          %424 = vmatpush1.msra.mxu0 0.0
          %425 = vmatprep.subr.mxu0 0.0
          %426 = vmatpush1.msra.mxu0 0.0
          %427 = vmatprep.subr.mxu0 0.0
          %428 = vmatpush1.msra.mxu0 0.0
          %429 = vmatprep.subr.mxu0 0.0
          %430 = vmatpush1.msra.mxu0 0.0
          %431 = vmatprep.subr.mxu0 0.0
          %432 = vmatpush1.msra.mxu0 0.0
          %433 = vmatprep.subr.mxu0 0.0
          %434 = vmatpush1.msra.mxu0 0.0
          %435 = vmatprep.subr.mxu0 0.0
          %436 = vmatpush1.msra.mxu0 0.0
          %437 = vmatprep.subr.mxu0 0.0
          %438 = vmatpush1.msra.mxu0 0.0
          %439 = vmatprep.subr.mxu0 0.0
          %440 = vmatpush1.msra.mxu0 0.0
          %441 = vmatprep.subr.mxu0 0.0
          %442 = vmatpush1.msra.mxu0 0.0
          %443 = vmatprep.subr.mxu0 0.0
          %444 = vmatpush1.msra.mxu0 0.0
          %445 = vmatprep.subr.mxu0 0.0
          %446 = vmatpush1.msra.mxu0 0.0
          %447 = vmatprep.subr.mxu0 0.0
          %448 = vmatpush1.msra.mxu0 0.0
          %449 = vmatprep.subr.mxu0 0.0
          %450 = vmatpush1.msra.mxu0 0.0
          %451 = vmatprep.subr.mxu0 0.0
          %452 = vmatpush1.msra.mxu0 0.0
          %453 = vmatprep.subr.mxu0 0.0
          %454 = vmatpush1.msra.mxu0 0.0
          %455 = vmatprep.subr.mxu0 0.0
          %456 = vmatpush1.msra.mxu0 0.0
          %457 = vmatprep.subr.mxu0 0.0
          %458 = vmatpush1.msra.mxu0 0.0
          %459 = vmatprep.subr.mxu0 0.0
          %460 = vmatpush1.msra.mxu0 0.0
          %461 = vmatprep.subr.mxu0 0.0
          %462 = vmatpush1.msra.mxu0 0.0
          %463 = vmatprep.subr.mxu0 0.0
          %464 = vmatpush1.msra.mxu0 0.0
          %465 = vmatprep.subr.mxu0 0.0
          %466 = vmatpush1.msra.mxu0 0.0
          %467 = vmatprep.subr.mxu0 0.0
          %468 = vmatpush1.msra.mxu0 0.0
          %469 = vmatprep.subr.mxu0 0.0
          %470 = vmatpush1.msra.mxu0 0.0
          %471 = vmatprep.subr.mxu0 0.0
          %472 = vmatpush1.msra.mxu0 0.0
          %473 = vmatprep.mubr.f32.mxu0 0.0
          %474 = vmatmul.mubr.f32.gmra.mrb[0].mxu0 %v404
          %v475 = vpop.f32.mrb[0].mxu0
          %v476 = vadd.f32 %v395, %v475
          %v477 = vpop.f32.mrb[0].mxu0
          %478 = vmatprep.mubr.f32.mxu0 0.0
          %479 = vmatmul.mubr.f32.gmra.mrb[0].mxu0 %v407
          %v480 = vpop.f32.mrb[0].mxu0
          %v481 = vadd.f32 %v400, %v480
          %v482 = vpop.f32.mrb[0].mxu0
          %483 = vdwg.mxu0
          %v484 = vmax.f32 %v476, 0.0
          %v485 = vmax.f32 %v481, 0.0
          %486 = vxpose.xlu0.b32.start [1/16] %v294, 128
          %487 = vxpose.xlu0.b32.cont [2/16] 0.0, 128
          %488 = vxpose.xlu0.b32.cont [3/16] 0.0, 128
          %489 = vxpose.xlu0.b32.cont [4/16] 0.0, 128
          %490 = vxpose.xlu0.b32.cont [5/16] 0.0, 128
          %491 = vxpose.xlu0.b32.cont [6/16] 0.0, 128
          %492 = vxpose.xlu0.b32.cont [7/16] 0.0, 128
          %493 = vxpose.xlu0.b32.cont [8/16] 0.0, 128
          %494 = vxpose.xlu0.b32.cont [9/16] 0.0, 128
          %495 = vxpose.xlu0.b32.cont [10/16] 0.0, 128
          %496 = vxpose.xlu0.b32.cont [11/16] 0.0, 128
          %497 = vxpose.xlu0.b32.cont [12/16] 0.0, 128
          %498 = vxpose.xlu0.b32.cont [13/16] 0.0, 128
          %499 = vxpose.xlu0.b32.cont [14/16] 0.0, 128
          %500 = vxpose.xlu0.b32.cont [15/16] 0.0, 128
          %501 = vxpose.xlu0.b32.end [16/16] 0.0, 128
          %v502 = vpop.trf.xlu0
          %v503 = vpop.trf.xlu0
          %v504 = vpop.trf.xlu0
          %v505 = vpop.trf.xlu0
          %v506 = vpop.trf.xlu0
          %v507 = vpop.trf.xlu0
          %v508 = vpop.trf.xlu0
          %v509 = vpop.trf.xlu0
          %v510 = vpop.trf.xlu0
          %v511 = vpop.trf.xlu0
          %v512 = vpop.trf.xlu0
          %v513 = vpop.trf.xlu0
          %v514 = vpop.trf.xlu0
          %v515 = vpop.trf.xlu0
          %v516 = vpop.trf.xlu0
          %v517 = vpop.trf.xlu0
          %519 = vset.pattern.permute.xlu0 0
          %520 = vperm.xlu0 %519, %v502
          %v521 = vpop.permute.xlu0 %520
          %524 = vset.pattern.permute.xlu0 0
          %525 = vperm.xlu0 %524, %v503
          %v526 = vpop.permute.xlu0 %525
          %v528 = vmul.f32 %v521, %v484
          %v529 = vmul.f32 %v526, %v485
          %v530 = vadd.f32 %v528, %v529
          %v531 = vrot.slane %v530, 4
          %v532 = vadd.f32 %v530, %v531
          %v533 = vrot.slane %v532, 2
          %v534 = vadd.f32 %v532, %v533
          %v535 = vrot.slane %v534, 1
          %v536 = vadd.f32 %v534, %v535
          %538 = vset.pattern.permute.xlu0 0
          %539 = vperm.xlu0 %538, %v295
          %v540 = vpop.permute.xlu0 %539
          %v542 = vlaneseq
          %v543 = vshrl.u32 %v542, 7
          %v544 = vsub.s32 0, %v543
          %v545 = vrot.slane %v540, %v544
          %v546 = vadd.f32 %v536, %v545
          %s547 = scalar_lea.vmem %s274, %s303 [#allocation3]
          %v548 = vlaneseq
          %vm549 = vcmp.ge.s32.totalorder %v548, 0
          %vm550 = vcmp.lt.s32.totalorder %v548, 128
          %vm551 = vmand %vm549, %vm550
          %552 = vst.msk [vmem:[%s547] sm:$0x1] %vm551, %v546
        $region53: #{tpu_custom_call.1} parent=47 // loop_footer
          %s301 = sadd.s32 1, %s297
        $region54: #{tpu_custom_call.1} parent=47 // loop_footer_branch
          %296 = sbr.rel target = $region50
        $region55: #{tpu_custom_call.1} parent=47 // loop_exit
          _
        %s553 = sand.u32 %s183, 1
        %s554 = scalar_lea.sflag [#allocation4], %s553
        %s555 = sand.u32 %s183, 1
        %s556 = smul.addr %s555, 2
        %s557 = scalar_lea.vmem [#allocation3], %s556
        // Predicated region
        $region56: #{tpu_custom_call.1} parent=47 // pred_check
          %p558 = pneg %p193
        $region57: #{tpu_custom_call.1} parent=47 // pred_check_branch
          %560 = sbr.rel (%p558) target = $region59
        $region58: #{tpu_custom_call.1} parent=47 // pred_region
          %s561 = smul.u32 2, %s23
          %s563 = ssub.s32 32, 32
          %564 = vsyncadd %s554, %s563
          %s565 = smul.addr %s561, 16
          %s566 = scalar_lea.hbm %s7, %s565
          %s568 = sshll.u32 %s557, 4
          %s569 = int_to_ptr.vmem [resolvable:$true] %s568
          %571 = dma.vmem_to_hbm [thread:$0]  %s569, 32, %s566, %s554
        $region59: #{tpu_custom_call.1} parent=47 // pred_fallthru
          _
      $region48: #{tpu_custom_call.1} parent=5 // pred_fallthru
        _
      %p572 = scmp.le.s32.totalorder 2, %s18
      // Predicated region
      $region60: #{tpu_custom_call.1} parent=5 // pred_check
        %p573 = pneg %p572
      $region61: #{tpu_custom_call.1} parent=5 // pred_check_branch
        %575 = sbr.rel (%p573) target = $region63
      $region62: #{tpu_custom_call.1} parent=5 // pred_region
        %s576 = ssub.s32 %s18, 2
        // Predicated region
        $region64: #{tpu_custom_call.1} parent=62 // pred_check
          %p577 = pneg %p199
        $region65: #{tpu_custom_call.1} parent=62 // pred_check_branch
          %579 = sbr.rel (%p577) target = $region67
        $region66: #{tpu_custom_call.1} parent=62 // pred_region
          %s580 = sand.u32 %s184, 1
          %s581 = scalar_lea.sflag [#allocation4], %s580
          %s582 = sand.u32 %s184, 1
          %s583 = smul.addr %s582, 2
          %s584 = scalar_lea.vmem [#allocation3], %s583
          %585 = dma.done %s581, 32
        $region67: #{tpu_custom_call.1} parent=62 // pred_fallthru
          _
      $region63: #{tpu_custom_call.1} parent=5 // pred_fallthru
        _
    $region6: #{tpu_custom_call.1} parent=1 // loop_footer
      %s22 = sadd.s32 1, %s18
    $region7: #{tpu_custom_call.1} parent=1 // loop_footer_branch
      %17 = sbr.rel target = $region3
    $region8: #{tpu_custom_call.1} parent=1 // loop_exit
      _
    %586 = vsyncpa [#allocation4], 1
    %s587 = scalar_lea.sflag [#allocation4], 1
    %588 = vsyncpa %s587, 1

</llo_original>
